<compile_context>
chip_gen: v7x
topology: tpu7x:2x2x1
jax: 0.10.0
libtpu: 0.0.40
codegen_flags: <defaults>
</compile_context>

<pallas_src>
import jax
import jax.numpy as jnp
from jax import lax
from jax.experimental import pallas as pl
from jax.experimental.pallas import tpu as pltpu

LANE = 128
SUBLANE = 8


def _round_up(x, m):
    return (x + m - 1) // m * m


def _cdiv(a, b):
    return -(-a // b)


# --------------------------------------------------------------------------
# Pallas kernel: gen_model MLP hot path
#   h   = relu(x1 @ W0a + x2 @ W0b + b0)        (first Linear, K split in two)
#   h   = relu(h @ Wi + bi)   for each middle layer
#   y^T = W_last^T @ h^T + b_last^T              (stored transposed, lane-dense)
# --------------------------------------------------------------------------
def _make_gen_kernel(n_mid):
    def kernel(x1_ref, x2_ref, w0a_ref, w0b_ref, b0_ref, *rest):
        o_ref = rest[-1]
        mid_refs = rest[:2 * n_mid]
        wlT_ref = rest[2 * n_mid]
        blT_ref = rest[2 * n_mid + 1]

        # Layer 0: two K-sliced bf16 matmuls with f32 accumulation (no concat
        # of [est_bv, noise] ever materialized).
        h32 = jnp.dot(x1_ref[...], w0a_ref[...],
                      preferred_element_type=jnp.float32)
        h32 = h32 + jnp.dot(x2_ref[...], w0b_ref[...],
                            preferred_element_type=jnp.float32)
        h32 = h32 + b0_ref[...]
        h = jnp.maximum(h32, 0.0).astype(w0a_ref.dtype)  # ReLU fused w/ bf16 cast

        for i in range(n_mid):
            w = mid_refs[2 * i][...]
            b = mid_refs[2 * i + 1][...]
            h32 = jnp.dot(h, w, preferred_element_type=jnp.float32) + b
            h = jnp.maximum(h32, 0.0).astype(w.dtype)

        # Last Linear, transposed:  y^T[o, m] = sum_k W^T[o, k] * h[m, k]
        # (standard MXU "NT" contraction).  Keeps the store lane-dense with
        # rows on the lane axis -> no 32x-inflated padded output write.
        yt = lax.dot_general(wlT_ref[...], h,
                             dimension_numbers=(((1,), (1,)), ((), ())),
                             preferred_element_type=jnp.float32)
        o_ref[...] = (yt + blT_ref[...]).astype(o_ref.dtype)

    return kernel


# --------------------------------------------------------------------------
# One-time parameter packing (hoisted out of the forward pass)
# --------------------------------------------------------------------------
def prepare_generator_params(weights, biases, d_est, latent_dim, img_dim,
                             weight_dtype=jnp.bfloat16):
    """Pad / cast / split the gen_model Linear parameters ONCE at init time."""
    hidden = weights[0].shape[1]
    hidden_pad = _round_up(hidden, LANE)
    cond_dim = weights[0].shape[0]
    assert cond_dim == d_est + latent_dim

    def pad_w(w, rows, cols):
        p = jnp.zeros((rows, cols), weight_dtype)
        return p.at[:w.shape[0], :w.shape[1]].set(w.astype(weight_dtype))

    def pad_b_row(b, cols):
        p = jnp.zeros((1, cols), jnp.float32)
        return p.at[0, :b.shape[0]].set(b.astype(jnp.float32))

    w0 = weights[0]
    packed = {
        "w0a": pad_w(w0[:d_est], d_est, hidden_pad),          # est_bv K-slice
        "w0b": pad_w(w0[d_est:], latent_dim, hidden_pad),     # noise  K-slice
        "b0": pad_b_row(biases[0], hidden_pad),
        "mids": tuple((pad_w(w, hidden_pad, hidden_pad), pad_b_row(b, hidden_pad))
                      for w, b in zip(weights[1:-1], biases[1:-1])),
    }
    out_sub = _round_up(img_dim, SUBLANE)
    packed["wlT"] = pad_w(weights[-1].T, out_sub, hidden_pad)  # (out_sub, hid)
    blT = jnp.zeros((out_sub, 1), jnp.float32)
    packed["blT"] = blT.at[:img_dim, 0].set(biases[-1].astype(jnp.float32))
    packed["img_dim"] = img_dim
    return packed


# --------------------------------------------------------------------------
# Tiling policy + Pallas wrapper
# --------------------------------------------------------------------------
def _choose_tiling(n_rows, tile_m):
    """Pick (row tile, padded rows, grid steps).

    Multi-step row tiles must be multiples of 128 because rows land on the
    lane axis of the transposed output.  Tiny batches run as one full-extent
    step (latency-trivial, no 128-padding blowup); large batches keep >= 2
    steps so both v7x TensorCores get work.
    """
    rows8 = _round_up(max(n_rows, 1), SUBLANE)
    if rows8 < 1024:
        return rows8, rows8, 1
    n_steps = max(2, _cdiv(rows8, tile_m))
    tile_rows = _round_up(_cdiv(rows8, n_steps), LANE)
    rows_pad = tile_rows * _cdiv(rows8, tile_rows)
    return tile_rows, rows_pad, rows_pad // tile_rows


def gen_mlp_pallas(est, noise, params, *, tile_m=2048):
    """gen_model MLP forward.  tile_m: ~2048-4096 on v6e/v7x, 1024-2048 on v5e."""
    n_rows = est.shape[0]
    w0a, w0b, b0 = params["w0a"], params["w0b"], params["b0"]
    mids, wlT, blT = params["mids"], params["wlT"], params["blT"]
    img_dim = params["img_dim"]
    d_est, latent_dim = w0a.shape[0], w0b.shape[0]
    hidden_pad = b0.shape[1]
    out_sub = wlT.shape[0]
    assert est.shape == (n_rows, d_est) and noise.shape == (n_rows, latent_dim)

    tile_rows, rows_pad, n_steps = _choose_tiling(n_rows, tile_m)

    cdt = w0a.dtype                      # bf16 inputs: half the x DMA / tile
    x1 = est.astype(cdt)
    x2 = noise.astype(cdt)
    if rows_pad != n_rows:
        x1 = jnp.pad(x1, ((0, rows_pad - n_rows), (0, 0)))
        x2 = jnp.pad(x2, ((0, rows_pad - n_rows), (0, 0)))

    wb_args = [w0a, w0b, b0]
    for w, b in mids:
        wb_args += [w, b]
    wb_args += [wlT, blT]
    # Grid-invariant parameter blocks (tiny; default double-buffering costs
    # < 200 KiB total, so single-buffering them isn't worth the dependency).
    wb_specs = [pl.BlockSpec(a.shape, lambda i: (0, 0)) for a in wb_args]

    in_specs = [pl.BlockSpec((tile_rows, d_est), lambda i: (i, 0)),
                pl.BlockSpec((tile_rows, latent_dim), lambda i: (i, 0))] + wb_specs
    out_spec = pl.BlockSpec((out_sub, tile_rows), lambda i: (0, i))

    # VMEM budget: double-buffered x/out tiles + params + per-layer activation
    # temporaries (f32 acc, bf16 copy, dot result) + Mosaic scratch slack.
    n_linear = 2 + len(mids)
    x_tiles = 2 * tile_rows * (d_est + latent_dim) * x1.dtype.itemsize
    out_tiles = 2 * out_sub * tile_rows * 4
    param_bytes = 2 * sum(int(a.nbytes) for a in wb_args)
    temp_bytes = (n_linear + 2) * tile_rows * hidden_pad * 4
    vmem_need = x_tiles + out_tiles + param_bytes + temp_bytes + (2 << 20)
    vmem_limit = int(min(max(vmem_need, 16 << 20), 48 << 20))   # v7x: 64 MiB/TC

    out_t = pl.pallas_call(
        _make_gen_kernel(len(mids)),
        out_shape=jax.ShapeDtypeStruct((out_sub, rows_pad), jnp.float32),
        grid=(n_steps,),
        in_specs=in_specs,
        out_specs=out_spec,
        compiler_params=pltpu.CompilerParams(
            dimension_semantics=("parallel",),
            vmem_limit_bytes=vmem_limit),
    )(x1, x2, *wb_args)

    # (out_sub, rows_pad) -> (n_rows, img_dim); only n_rows*img_dim*4 B move.
    return out_t[:img_dim, :n_rows].T


# --------------------------------------------------------------------------
# Parameter initialization (xavier-uniform weights, torch-style Linear biases)
# --------------------------------------------------------------------------
def xavier_uniform(key, shape, dtype=jnp.float32):
    fan_in, fan_out = shape[0], shape[1]
    bound = (6.0 / (fan_in + fan_out)) ** 0.5
    return jax.random.uniform(key, shape, dtype, minval=-bound, maxval=bound)


def linear_bias(key, fan_in, dim, dtype=jnp.float32):
    bound = 1.0 / (fan_in ** 0.5)
    return jax.random.uniform(key, (dim,), dtype, minval=-bound, maxval=bound)


def init_generator_params(key, cond_dim, hidden_dim, img_dim, n_layers):
    """Builds the n_layers+1 Linear layers of gen_model."""
    dims = [cond_dim] + [hidden_dim] * n_layers + [img_dim]
    weights, biases = [], []
    for i in range(len(dims) - 1):
        key, kw, kb = jax.random.split(key, 3)
        weights.append(xavier_uniform(kw, (dims[i], dims[i + 1])))
        biases.append(linear_bias(kb, dims[i], dims[i + 1]))
    return weights, biases


# --------------------------------------------------------------------------
# Transformer stub.
# TODO(synk): the real `transformer` is an external nn.Module passed into
# Generator.__init__; it is stubbed here as a deterministic linear projection
# producing (n_batch, n_alt, d_out) so the generator pipeline can run.
# --------------------------------------------------------------------------
def transformer_stub(params, driver_src, bv_src, src_key_mask):
    w_bv, w_dr, b_t = params
    est = jnp.einsum("baf,fd->bad", bv_src, w_bv)
    est = est + jnp.einsum("bf,fd->bd", driver_src, w_dr)[:, None, :] + b_t
    return est  # (n_batch, n_alt, d_out)


# --------------------------------------------------------------------------
# Generator forward pass
# --------------------------------------------------------------------------
def generator_forward(packed_params, trans_params, driver_src, bv_src,
                      latent_dim, src_key_mask=None, noise=None,
                      noise_key=None, tile_m=2048):
    n_batch, n_alt, _ = bv_src.shape
    if src_key_mask is None:
        src_key_mask = jnp.zeros((n_batch, n_alt), dtype=bool)
    est_bv = transformer_stub(trans_params, driver_src, bv_src, src_key_mask)
    est_bv = est_bv.reshape(n_batch * n_alt, -1)          # flatten(0, 1)
    if noise is None:
        # TODO(synk): optionally generate the noise in-kernel
        # (pltpu.prng_seed + pltpu.stateful_normal) to drop this HBM round trip.
        noise = jax.random.normal(noise_key, (est_bv.shape[0], latent_dim),
                                  dtype=driver_src.dtype)
    fake = gen_mlp_pallas(est_bv, noise, packed_params, tile_m=tile_m)
    # NOTE: reshape assumes img_dim == n_bv_feat (as in the PyTorch module).
    return fake.reshape(bv_src.shape)


# --------------------------------------------------------------------------
# Pure-JAX reference (same bf16-matmul / f32-accumulate / bf16-activation)
# --------------------------------------------------------------------------
def mlp_ref(est, noise, weights, biases, weight_dtype=jnp.bfloat16):
    h = jnp.concatenate([est, noise], axis=1).astype(weight_dtype)
    y = None
    for i, (w, b) in enumerate(zip(weights, biases)):
        y = jnp.dot(h, w.astype(weight_dtype),
                    preferred_element_type=jnp.float32) + b.astype(jnp.float32)
        if i < len(weights) - 1:
            h = jnp.maximum(y, 0.0).astype(weight_dtype)
    return y


if __name__ == "__main__":
    n_dr_feat = 4
    n_bv_feat = 4            # img_dim  (const.n_bv_feat)
    d_out = 8                # transformer.d_out
    latent_dim = 16
    hidden_dim = 128         # module default
    n_layers = 4
    cond_dim = d_out + latent_dim

    key = jax.random.PRNGKey(0)
    (k_gen, k_t1, k_t2,
     k_dr1, k_bv1, k_n1,
     k_dr2, k_bv2, k_n2,
     k_dr3, k_bv3, k_n3, k_nn) = jax.random.split(key, 13)

    gen_weights, gen_biases = init_generator_params(
        k_gen, cond_dim, hidden_dim, n_bv_feat, n_layers)
    packed = prepare_generator_params(gen_weights, gen_biases,
                                      d_est=d_out, latent_dim=latent_dim,
                                      img_dim=n_bv_feat)
    trans_params = (
        xavier_uniform(k_t1, (n_bv_feat, d_out)),
        xavier_uniform(k_t2, (n_dr_feat, d_out)),
        jnp.zeros((d_out,), jnp.float32),
    )

    def check_case(kd, kb, kn, n_batch, n_alt):
        driver = jax.random.normal(kd, (n_batch, n_dr_feat), jnp.float32)
        bv = jax.random.normal(kb, (n_batch, n_alt, n_bv_feat), jnp.float32)
        noise = jax.random.normal(kn, (n_batch * n_alt, latent_dim), jnp.float32)
        out = generator_forward(packed, trans_params, driver, bv,
                                latent_dim=latent_dim, noise=noise)
        out = jax.block_until_ready(out)
        assert out.shape == bv.shape
        est = transformer_stub(trans_params, driver, bv, None)
        est = est.reshape(n_batch * n_alt, -1)
        ref = mlp_ref(est, noise, gen_weights, gen_biases).reshape(bv.shape)
        err = float(jnp.max(jnp.abs(out - ref)))
        assert jnp.allclose(out, ref, atol=1e-2, rtol=1e-2), err

    # 1) module-typical tiny batch (single full-extent grid step)
    check_case(k_dr1, k_bv1, k_n1, n_batch=2, n_alt=8)
    # 2) odd row count (exercises row padding)
    check_case(k_dr3, k_bv3, k_n3, n_batch=3, n_alt=5)
    # 3) larger batch: 1024 rows -> 2-step "parallel" grid, lane-dense tiles
    check_case(k_dr2, k_bv2, k_n2, n_batch=64, n_alt=16)

    # 4) noise=None path (wrapper-side sampling, matches module default)
    driver = jax.random.normal(k_dr1, (2, n_dr_feat), jnp.float32)
    bv = jax.random.normal(k_bv1, (2, 8, n_bv_feat), jnp.float32)
    out = generator_forward(packed, trans_params, driver, bv,
                            latent_dim=latent_dim, noise_key=k_nn)
    out = jax.block_until_ready(out)
    assert out.shape == bv.shape and bool(jnp.all(jnp.isfinite(out)))

    print("KERNEL_OK")
</pallas_src>

<mosaic_0001>
module attributes {stable_mosaic.version = 11 : i64} {
  func.func @kernel(%arg0: i32, %arg1: memref<16x8xbf16, #tpu.memory_space<vmem>>, %arg2: memref<16x16xbf16, #tpu.memory_space<vmem>>, %arg3: memref<8x128xbf16, #tpu.memory_space<vmem>>, %arg4: memref<16x128xbf16, #tpu.memory_space<vmem>>, %arg5: memref<1x128xf32, #tpu.memory_space<vmem>>, %arg6: memref<128x128xbf16, #tpu.memory_space<vmem>>, %arg7: memref<1x128xf32, #tpu.memory_space<vmem>>, %arg8: memref<128x128xbf16, #tpu.memory_space<vmem>>, %arg9: memref<1x128xf32, #tpu.memory_space<vmem>>, %arg10: memref<128x128xbf16, #tpu.memory_space<vmem>>, %arg11: memref<1x128xf32, #tpu.memory_space<vmem>>, %arg12: memref<8x128xbf16, #tpu.memory_space<vmem>>, %arg13: memref<8x1xf32, #tpu.memory_space<vmem>>, %arg14: memref<8x16xf32, #tpu.memory_space<vmem>>) attributes {dimension_semantics = [#tpu.dimension_semantics<parallel>], iteration_bounds = array<i64: 1>, scalar_prefetch = 0 : i64, scratch_operands = 0 : i64, tpu.core_type = #tpu.core_type<tc>, window_params = [{transform_indices = @transform_0, window_bounds = array<i64: 16, 8>}, {transform_indices = @transform_1, window_bounds = array<i64: 16, 16>}, {pipeline_mode = #tpu.pipeline_mode<synchronous>, transform_indices = @transform_2, window_bounds = array<i64: 8, 128>}, {pipeline_mode = #tpu.pipeline_mode<synchronous>, transform_indices = @transform_3, window_bounds = array<i64: 16, 128>}, {pipeline_mode = #tpu.pipeline_mode<synchronous>, transform_indices = @transform_4, window_bounds = array<i64: 1, 128>}, {pipeline_mode = #tpu.pipeline_mode<synchronous>, transform_indices = @transform_5, window_bounds = array<i64: 128, 128>}, {pipeline_mode = #tpu.pipeline_mode<synchronous>, transform_indices = @transform_6, window_bounds = array<i64: 1, 128>}, {pipeline_mode = #tpu.pipeline_mode<synchronous>, transform_indices = @transform_7, window_bounds = array<i64: 128, 128>}, {pipeline_mode = #tpu.pipeline_mode<synchronous>, transform_indices = @transform_8, window_bounds = array<i64: 1, 128>}, {pipeline_mode = #tpu.pipeline_mode<synchronous>, transform_indices = @transform_9, window_bounds = array<i64: 128, 128>}, {pipeline_mode = #tpu.pipeline_mode<synchronous>, transform_indices = @transform_10, window_bounds = array<i64: 1, 128>}, {pipeline_mode = #tpu.pipeline_mode<synchronous>, transform_indices = @transform_11, window_bounds = array<i64: 8, 128>}, {pipeline_mode = #tpu.pipeline_mode<synchronous>, transform_indices = @transform_12, window_bounds = array<i64: 8, 1>}, {transform_indices = @transform_13, window_bounds = array<i64: 8, 16>}]} {
    %c0 = arith.constant 0 : index
    %c0_0 = arith.constant 0 : index
    %0 = vector.load %arg1[%c0, %c0_0] : memref<16x8xbf16, #tpu.memory_space<vmem>>, vector<16x8xbf16>
    %c0_1 = arith.constant 0 : index
    %c0_2 = arith.constant 0 : index
    %1 = vector.load %arg3[%c0_1, %c0_2] : memref<8x128xbf16, #tpu.memory_space<vmem>>, vector<8x128xbf16>
    %cst = arith.constant dense<0.000000e+00> : vector<16x128xf32>
    %2 = tpu.matmul %0, %1, %cst {dimension_numbers = #tpu.dot_dimension_numbers<[1], [0], [0], [1], [0, 0, 1, 1], [], []>} : vector<16x8xbf16>, vector<8x128xbf16>, vector<16x128xf32> -> vector<16x128xf32>
    %c0_3 = arith.constant 0 : index
    %c0_4 = arith.constant 0 : index
    %3 = vector.load %arg2[%c0_3, %c0_4] : memref<16x16xbf16, #tpu.memory_space<vmem>>, vector<16x16xbf16>
    %c0_5 = arith.constant 0 : index
    %c0_6 = arith.constant 0 : index
    %4 = vector.load %arg4[%c0_5, %c0_6] : memref<16x128xbf16, #tpu.memory_space<vmem>>, vector<16x128xbf16>
    %cst_7 = arith.constant dense<0.000000e+00> : vector<16x128xf32>
    %5 = tpu.matmul %3, %4, %cst_7 {dimension_numbers = #tpu.dot_dimension_numbers<[1], [0], [0], [1], [0, 0, 1, 1], [], []>} : vector<16x16xbf16>, vector<16x128xbf16>, vector<16x128xf32> -> vector<16x128xf32>
    %6 = arith.addf %2, %5 : vector<16x128xf32>
    %c0_8 = arith.constant 0 : index
    %c0_9 = arith.constant 0 : index
    %7 = vector.load %arg5[%c0_8, %c0_9] : memref<1x128xf32, #tpu.memory_space<vmem>>, vector<1x128xf32>
    %8 = vector.broadcast %7 : vector<1x128xf32> to vector<16x128xf32>
    %9 = arith.addf %6, %8 : vector<16x128xf32>
    %cst_10 = arith.constant 0.000000e+00 : f32
    %10 = vector.broadcast %cst_10 : f32 to vector<16x128xf32>
    %11 = arith.maximumf %9, %10 : vector<16x128xf32>
    %12 = arith.truncf %11 : vector<16x128xf32> to vector<16x128xbf16>
    %c0_11 = arith.constant 0 : index
    %c0_12 = arith.constant 0 : index
    %13 = vector.load %arg6[%c0_11, %c0_12] : memref<128x128xbf16, #tpu.memory_space<vmem>>, vector<128x128xbf16>
    %c0_13 = arith.constant 0 : index
    %c0_14 = arith.constant 0 : index
    %14 = vector.load %arg7[%c0_13, %c0_14] : memref<1x128xf32, #tpu.memory_space<vmem>>, vector<1x128xf32>
    %cst_15 = arith.constant dense<0.000000e+00> : vector<16x128xf32>
    %15 = tpu.matmul %12, %13, %cst_15 {dimension_numbers = #tpu.dot_dimension_numbers<[1], [0], [0], [1], [0, 0, 1, 1], [], []>} : vector<16x128xbf16>, vector<128x128xbf16>, vector<16x128xf32> -> vector<16x128xf32>
    %16 = vector.broadcast %14 : vector<1x128xf32> to vector<16x128xf32>
    %17 = arith.addf %15, %16 : vector<16x128xf32>
    %cst_16 = arith.constant 0.000000e+00 : f32
    %18 = vector.broadcast %cst_16 : f32 to vector<16x128xf32>
    %19 = arith.maximumf %17, %18 : vector<16x128xf32>
    %20 = arith.truncf %19 : vector<16x128xf32> to vector<16x128xbf16>
    %c0_17 = arith.constant 0 : index
    %c0_18 = arith.constant 0 : index
    %21 = vector.load %arg8[%c0_17, %c0_18] : memref<128x128xbf16, #tpu.memory_space<vmem>>, vector<128x128xbf16>
    %c0_19 = arith.constant 0 : index
    %c0_20 = arith.constant 0 : index
    %22 = vector.load %arg9[%c0_19, %c0_20] : memref<1x128xf32, #tpu.memory_space<vmem>>, vector<1x128xf32>
    %cst_21 = arith.constant dense<0.000000e+00> : vector<16x128xf32>
    %23 = tpu.matmul %20, %21, %cst_21 {dimension_numbers = #tpu.dot_dimension_numbers<[1], [0], [0], [1], [0, 0, 1, 1], [], []>} : vector<16x128xbf16>, vector<128x128xbf16>, vector<16x128xf32> -> vector<16x128xf32>
    %24 = vector.broadcast %22 : vector<1x128xf32> to vector<16x128xf32>
    %25 = arith.addf %23, %24 : vector<16x128xf32>
    %cst_22 = arith.constant 0.000000e+00 : f32
    %26 = vector.broadcast %cst_22 : f32 to vector<16x128xf32>
    %27 = arith.maximumf %25, %26 : vector<16x128xf32>
    %28 = arith.truncf %27 : vector<16x128xf32> to vector<16x128xbf16>
    %c0_23 = arith.constant 0 : index
    %c0_24 = arith.constant 0 : index
    %29 = vector.load %arg10[%c0_23, %c0_24] : memref<128x128xbf16, #tpu.memory_space<vmem>>, vector<128x128xbf16>
    %c0_25 = arith.constant 0 : index
    %c0_26 = arith.constant 0 : index
    %30 = vector.load %arg11[%c0_25, %c0_26] : memref<1x128xf32, #tpu.memory_space<vmem>>, vector<1x128xf32>
    %cst_27 = arith.constant dense<0.000000e+00> : vector<16x128xf32>
    %31 = tpu.matmul %28, %29, %cst_27 {dimension_numbers = #tpu.dot_dimension_numbers<[1], [0], [0], [1], [0, 0, 1, 1], [], []>} : vector<16x128xbf16>, vector<128x128xbf16>, vector<16x128xf32> -> vector<16x128xf32>
    %32 = vector.broadcast %30 : vector<1x128xf32> to vector<16x128xf32>
    %33 = arith.addf %31, %32 : vector<16x128xf32>
    %cst_28 = arith.constant 0.000000e+00 : f32
    %34 = vector.broadcast %cst_28 : f32 to vector<16x128xf32>
    %35 = arith.maximumf %33, %34 : vector<16x128xf32>
    %36 = arith.truncf %35 : vector<16x128xf32> to vector<16x128xbf16>
    %c0_29 = arith.constant 0 : index
    %c0_30 = arith.constant 0 : index
    %37 = vector.load %arg12[%c0_29, %c0_30] : memref<8x128xbf16, #tpu.memory_space<vmem>>, vector<8x128xbf16>
    %cst_31 = arith.constant dense<0.000000e+00> : vector<8x16xf32>
    %38 = tpu.matmul %37, %36, %cst_31 {dimension_numbers = #tpu.dot_dimension_numbers<[1], [1], [0], [0], [0, 0, 1, 0], [], []>} : vector<8x128xbf16>, vector<16x128xbf16>, vector<8x16xf32> -> vector<8x16xf32>
    %c0_32 = arith.constant 0 : index
    %c0_33 = arith.constant 0 : index
    %39 = vector.load %arg13[%c0_32, %c0_33] : memref<8x1xf32, #tpu.memory_space<vmem>>, vector<8x1xf32>
    %40 = vector.broadcast %39 : vector<8x1xf32> to vector<8x16xf32>
    %41 = arith.addf %38, %40 : vector<8x16xf32>
    %c0_34 = arith.constant 0 : index
    %c0_35 = arith.constant 0 : index
    %42 = vector.load %arg14[%c0_34, %c0_35] : memref<8x16xf32, #tpu.memory_space<vmem>>, vector<8x16xf32>
    tpu.vector_store %arg14[%c0_34, %c0_35], %41 {strides = array<i32>} : memref<8x16xf32, #tpu.memory_space<vmem>>, vector<8x16xf32>,
    return
  }
  func.func @transform_0(%arg0: i32) -> (i32, i32) {
    %c0_i32 = arith.constant 0 : i32
    %c0_i32_0 = arith.constant 0 : i32
    return %arg0, %c0_i32 : i32, i32
  }
  func.func @transform_1(%arg0: i32) -> (i32, i32) {
    %c0_i32 = arith.constant 0 : i32
    %c0_i32_0 = arith.constant 0 : i32
    return %arg0, %c0_i32 : i32, i32
  }
  func.func @transform_2(%arg0: i32) -> (i32, i32) {
    %c0_i32 = arith.constant 0 : i32
    %c0_i32_0 = arith.constant 0 : i32
    %c0_i32_1 = arith.constant 0 : i32
    return %c0_i32, %c0_i32_0 : i32, i32
  }
  func.func @transform_3(%arg0: i32) -> (i32, i32) {
    %c0_i32 = arith.constant 0 : i32
    %c0_i32_0 = arith.constant 0 : i32
    %c0_i32_1 = arith.constant 0 : i32
    return %c0_i32, %c0_i32_0 : i32, i32
  }
  func.func @transform_4(%arg0: i32) -> (i32, i32) {
    %c0_i32 = arith.constant 0 : i32
    %c0_i32_0 = arith.constant 0 : i32
    %c0_i32_1 = arith.constant 0 : i32
    return %c0_i32, %c0_i32_0 : i32, i32
  }
  func.func @transform_5(%arg0: i32) -> (i32, i32) {
    %c0_i32 = arith.constant 0 : i32
    %c0_i32_0 = arith.constant 0 : i32
    %c0_i32_1 = arith.constant 0 : i32
    return %c0_i32, %c0_i32_0 : i32, i32
  }
  func.func @transform_6(%arg0: i32) -> (i32, i32) {
    %c0_i32 = arith.constant 0 : i32
    %c0_i32_0 = arith.constant 0 : i32
    %c0_i32_1 = arith.constant 0 : i32
    return %c0_i32, %c0_i32_0 : i32, i32
  }
  func.func @transform_7(%arg0: i32) -> (i32, i32) {
    %c0_i32 = arith.constant 0 : i32
    %c0_i32_0 = arith.constant 0 : i32
    %c0_i32_1 = arith.constant 0 : i32
    return %c0_i32, %c0_i32_0 : i32, i32
  }
  func.func @transform_8(%arg0: i32) -> (i32, i32) {
    %c0_i32 = arith.constant 0 : i32
    %c0_i32_0 = arith.constant 0 : i32
    %c0_i32_1 = arith.constant 0 : i32
    return %c0_i32, %c0_i32_0 : i32, i32
  }
  func.func @transform_9(%arg0: i32) -> (i32, i32) {
    %c0_i32 = arith.constant 0 : i32
    %c0_i32_0 = arith.constant 0 : i32
    %c0_i32_1 = arith.constant 0 : i32
    return %c0_i32, %c0_i32_0 : i32, i32
  }
  func.func @transform_10(%arg0: i32) -> (i32, i32) {
    %c0_i32 = arith.constant 0 : i32
    %c0_i32_0 = arith.constant 0 : i32
    %c0_i32_1 = arith.constant 0 : i32
    return %c0_i32, %c0_i32_0 : i32, i32
  }
  func.func @transform_11(%arg0: i32) -> (i32, i32) {
    %c0_i32 = arith.constant 0 : i32
    %c0_i32_0 = arith.constant 0 : i32
    %c0_i32_1 = arith.constant 0 : i32
    return %c0_i32, %c0_i32_0 : i32, i32
  }
  func.func @transform_12(%arg0: i32) -> (i32, i32) {
    %c0_i32 = arith.constant 0 : i32
    %c0_i32_0 = arith.constant 0 : i32
    %c0_i32_1 = arith.constant 0 : i32
    return %c0_i32, %c0_i32_0 : i32, i32
  }
  func.func @transform_13(%arg0: i32) -> (i32, i32) {
    %c0_i32 = arith.constant 0 : i32
    %c0_i32_0 = arith.constant 0 : i32
    return %c0_i32, %arg0 : i32, i32
  }
}

</mosaic_0001>

<llo_original>
// kernel: tpu_custom_call.1
$region0: #{tpu_custom_call.1}
  #allocation0 [shape = 'u32[]', space=smem, size = 0x4, offset = 0x4, fixed_abs, tag = 'smem constant byte address 0x4 - core index']
  #allocation1 [shape = 'u32[144,128]{1,0:T(1,128)}', space=vmem, size = 0x12000, scoped, tag = 'internal scratch']
  %s0 = inlined_call_operand.vmem [shape: bf16[16,8], index: 0, kind: input, shape index: {}]
  %s1 = inlined_call_operand.vmem [shape: bf16[16,16], index: 1, kind: input, shape index: {}]
  %s2 = inlined_call_operand.vmem [shape: bf16[8,128], index: 2, kind: input, shape index: {}]
  %s3 = inlined_call_operand.vmem [shape: bf16[16,128], index: 3, kind: input, shape index: {}]
  %s4 = inlined_call_operand.vmem [shape: f32[1,128], index: 4, kind: input, shape index: {}]
  %s5 = inlined_call_operand.hbm [shape: bf16[128,128], index: 5, kind: input, shape index: {}]
  %s6 = inlined_call_operand.vmem [shape: f32[1,128], index: 6, kind: input, shape index: {}]
  %s7 = inlined_call_operand.hbm [shape: bf16[128,128], index: 7, kind: input, shape index: {}]
  %s8 = inlined_call_operand.vmem [shape: f32[1,128], index: 8, kind: input, shape index: {}]
  %s9 = inlined_call_operand.hbm [shape: bf16[128,128], index: 9, kind: input, shape index: {}]
  %s10 = inlined_call_operand.vmem [shape: f32[1,128], index: 10, kind: input, shape index: {}]
  %s11 = inlined_call_operand.vmem [shape: bf16[8,128], index: 11, kind: input, shape index: {}]
  %s12 = inlined_call_operand.vmem [shape: f32[8,1], index: 12, kind: input, shape index: {}]
  %s13 = inlined_call_operand.hbm [shape: f32[8,16], index: 13, kind: output, shape index: {}]
  %s14 = sld [smem:[#allocation0]]
  $region74: #{tpu_custom_call.1} parent=0
    _
  %s16 = ssub.s32 1, %s14
  %s17 = scalar_select 0, %s16, %s14
  $region1: #{tpu_custom_call.1} parent=0
    #allocation2 [shape = 'u8[32768]{0}', space=vmem, size = 0x8000, scoped, tag = 'input window, operand 5, single buffered']
    #allocation3 [shape = 's32[1]{0}', space=sflag, size = 0x4, scoped, tag = 'scoped memory for tpu_custom_call.1']
    #allocation4 [shape = 's32[1]{0}', space=sflag, size = 0x4, scoped, tag = 'scoped memory for tpu_custom_call.1']
    #allocation5 [shape = 'u8[32768]{0}', space=vmem, size = 0x8000, scoped, tag = 'input window, operand 7, single buffered']
    #allocation6 [shape = 's32[1]{0}', space=sflag, size = 0x4, scoped, tag = 'scoped memory for tpu_custom_call.1']
    #allocation7 [shape = 'u8[32768]{0}', space=vmem, size = 0x8000, scoped, tag = 'input window, operand 9, single buffered']
    #allocation8 [shape = 'u8[4096]{0}', space=vmem, size = 0x1000, scoped, tag = 'output window, operand 0, single buffered']
    %18 = vsyncpa [#allocation3], 0
    %19 = vsyncpa [#allocation6], 0
    %20 = vsyncpa [#allocation4], 0
    // Predicated region
    $region2: #{tpu_custom_call.1} parent=1 // pred_check
      _
    $region3: #{tpu_custom_call.1} parent=1 // pred_check_branch
      %22 = sbr.rel (0) target = $region5
    $region4: #{tpu_custom_call.1} parent=1 // pred_region
      _
    $region5: #{tpu_custom_call.1} parent=1 // pred_fallthru
      _
    // Predicated region
    $region6: #{tpu_custom_call.1} parent=1 // pred_check
      _
    $region7: #{tpu_custom_call.1} parent=1 // pred_check_branch
      %24 = sbr.rel (0) target = $region9
    $region8: #{tpu_custom_call.1} parent=1 // pred_region
      _
    $region9: #{tpu_custom_call.1} parent=1 // pred_fallthru
      _
    // Predicated region
    $region10: #{tpu_custom_call.1} parent=1 // pred_check
      _
    $region11: #{tpu_custom_call.1} parent=1 // pred_check_branch
      %26 = sbr.rel (0) target = $region13
    $region12: #{tpu_custom_call.1} parent=1 // pred_region
      _
    $region13: #{tpu_custom_call.1} parent=1 // pred_fallthru
      _
    // Predicated region
    $region14: #{tpu_custom_call.1} parent=1 // pred_check
      _
    $region15: #{tpu_custom_call.1} parent=1 // pred_check_branch
      %28 = sbr.rel (0) target = $region17
    $region16: #{tpu_custom_call.1} parent=1 // pred_region
      _
    $region17: #{tpu_custom_call.1} parent=1 // pred_fallthru
      _
    // Predicated region
    $region18: #{tpu_custom_call.1} parent=1 // pred_check
      _
    $region19: #{tpu_custom_call.1} parent=1 // pred_check_branch
      %30 = sbr.rel (0) target = $region21
    $region20: #{tpu_custom_call.1} parent=1 // pred_region
      _
    $region21: #{tpu_custom_call.1} parent=1 // pred_fallthru
      _
    // Predicated region
    $region22: #{tpu_custom_call.1} parent=1 // pred_check
      _
    $region23: #{tpu_custom_call.1} parent=1 // pred_check_branch
      %32 = sbr.rel (0) target = $region25
    $region24: #{tpu_custom_call.1} parent=1 // pred_region
      %s34 = ssub.s32 1024, 1024
      %35 = vsyncadd [#allocation3], %s34
      %s36 = sshll.u32 [#allocation2], 4
      %s37 = int_to_ptr.vmem [resolvable:$true] %s36
      %42 = dma.hbm_to_vmem [thread:$0]  %s5, 1024, %s37, [#allocation3], 64, 64, 4
    $region25: #{tpu_custom_call.1} parent=1 // pred_fallthru
      _
    // Predicated region
    $region26: #{tpu_custom_call.1} parent=1 // pred_check
      _
    $region27: #{tpu_custom_call.1} parent=1 // pred_check_branch
      %44 = sbr.rel (0) target = $region29
    $region28: #{tpu_custom_call.1} parent=1 // pred_region
      _
    $region29: #{tpu_custom_call.1} parent=1 // pred_fallthru
      _
    // Predicated region
    $region30: #{tpu_custom_call.1} parent=1 // pred_check
      _
    $region31: #{tpu_custom_call.1} parent=1 // pred_check_branch
      %46 = sbr.rel (0) target = $region33
    $region32: #{tpu_custom_call.1} parent=1 // pred_region
      %s48 = ssub.s32 1024, 1024
      %49 = vsyncadd [#allocation6], %s48
      %s50 = sshll.u32 [#allocation5], 4
      %s51 = int_to_ptr.vmem [resolvable:$true] %s50
      %56 = dma.hbm_to_vmem [thread:$0]  %s7, 1024, %s51, [#allocation6], 64, 64, 4
    $region33: #{tpu_custom_call.1} parent=1 // pred_fallthru
      _
    // Predicated region
    $region34: #{tpu_custom_call.1} parent=1 // pred_check
      _
    $region35: #{tpu_custom_call.1} parent=1 // pred_check_branch
      %58 = sbr.rel (0) target = $region37
    $region36: #{tpu_custom_call.1} parent=1 // pred_region
      _
    $region37: #{tpu_custom_call.1} parent=1 // pred_fallthru
      _
    // Predicated region
    $region38: #{tpu_custom_call.1} parent=1 // pred_check
      _
    $region39: #{tpu_custom_call.1} parent=1 // pred_check_branch
      %60 = sbr.rel (0) target = $region41
    $region40: #{tpu_custom_call.1} parent=1 // pred_region
      %s62 = ssub.s32 1024, 1024
      %63 = vsyncadd [#allocation6], %s62
      %s64 = sshll.u32 [#allocation7], 4
      %s65 = int_to_ptr.vmem [resolvable:$true] %s64
      %70 = dma.hbm_to_vmem [thread:$0]  %s9, 1024, %s65, [#allocation6], 64, 64, 4
    $region41: #{tpu_custom_call.1} parent=1 // pred_fallthru
      _
    // Predicated region
    $region42: #{tpu_custom_call.1} parent=1 // pred_check
      _
    $region43: #{tpu_custom_call.1} parent=1 // pred_check_branch
      %72 = sbr.rel (0) target = $region45
    $region44: #{tpu_custom_call.1} parent=1 // pred_region
      _
    $region45: #{tpu_custom_call.1} parent=1 // pred_fallthru
      _
    // Predicated region
    $region46: #{tpu_custom_call.1} parent=1 // pred_check
      _
    $region47: #{tpu_custom_call.1} parent=1 // pred_check_branch
      %74 = sbr.rel (0) target = $region49
    $region48: #{tpu_custom_call.1} parent=1 // pred_region
      _
    $region49: #{tpu_custom_call.1} parent=1 // pred_fallthru
      _
    // Predicated region
    $region50: #{tpu_custom_call.1} parent=1 // pred_check
      _
    $region51: #{tpu_custom_call.1} parent=1 // pred_check_branch
      %76 = sbr.rel (0) target = $region53
    $region52: #{tpu_custom_call.1} parent=1 // pred_region
      _
    $region53: #{tpu_custom_call.1} parent=1 // pred_fallthru
      _
    // Predicated region
    $region54: #{tpu_custom_call.1} parent=1 // pred_check
      _
    $region55: #{tpu_custom_call.1} parent=1 // pred_check_branch
      %78 = sbr.rel (0) target = $region57
    $region56: #{tpu_custom_call.1} parent=1 // pred_region
      %79 = dma.done [#allocation3], 1024
    $region57: #{tpu_custom_call.1} parent=1 // pred_fallthru
      _
    // Predicated region
    $region58: #{tpu_custom_call.1} parent=1 // pred_check
      _
    $region59: #{tpu_custom_call.1} parent=1 // pred_check_branch
      %81 = sbr.rel (0) target = $region61
    $region60: #{tpu_custom_call.1} parent=1 // pred_region
      %82 = dma.done [#allocation6], 1024
    $region61: #{tpu_custom_call.1} parent=1 // pred_fallthru
      _
    // Predicated region
    $region62: #{tpu_custom_call.1} parent=1 // pred_check
      _
    $region63: #{tpu_custom_call.1} parent=1 // pred_check_branch
      %84 = sbr.rel (0) target = $region65
    $region64: #{tpu_custom_call.1} parent=1 // pred_region
      %85 = dma.done [#allocation6], 1024
    $region65: #{tpu_custom_call.1} parent=1 // pred_fallthru
      _
    %v87 = vld [vmem:[%s0] sm:$0xf]
    %v88 = vld [vmem:[%s0 + $0x4] sm:$0xf]
    %v89 = vld [vmem:[%s2] sm:$0xf]
    %v90 = vld [vmem:[%s1] sm:$0xf]
    %v91 = vld [vmem:[%s1 + $0x4] sm:$0xf]
    %v92 = vld [vmem:[%s3] sm:$0xf]
    %v93 = vld [vmem:[%s3 + $0x4] sm:$0xf]
    %v96 = vunpack.c.l.b16 %v90
    %v97 = vunpack.c.l.b16 %v91
    %v98 = vpack.c.b16 %v97, %v96
    %v101 = vunpack.c.l.b16 %v92
    %v102 = vunpack.c.l.b16 %v93
    %v103 = vpack.c.b16 %v102, %v101
    %vm105 = vcmask 130048
    %v107 = vsel %vm105, %v98, 0
    %109 = vmatprep.subr.bf16.mxu0 0
    %110 = vmatpush1.bf16.msra.mxu0 %v103
    %111 = vmatprep.subr.bf16.mxu0 0
    %112 = vmatpush1.bf16.msra.mxu0 0
    %113 = vmatprep.subr.bf16.mxu0 0
    %114 = vmatpush1.bf16.msra.mxu0 0
    %115 = vmatprep.subr.bf16.mxu0 0
    %116 = vmatpush1.bf16.msra.mxu0 0
    %117 = vmatprep.subr.bf16.mxu0 0
    %118 = vmatpush1.bf16.msra.mxu0 0
    %119 = vmatprep.subr.bf16.mxu0 0
    %120 = vmatpush1.bf16.msra.mxu0 0
    %121 = vmatprep.subr.bf16.mxu0 0
    %122 = vmatpush1.bf16.msra.mxu0 0
    %123 = vmatprep.subr.bf16.mxu0 0
    %124 = vmatpush1.bf16.msra.mxu0 0
    %125 = vmatprep.subr.bf16.mxu0 0
    %126 = vmatpush1.bf16.msra.mxu0 0
    %127 = vmatprep.subr.bf16.mxu0 0
    %128 = vmatpush1.bf16.msra.mxu0 0
    %129 = vmatprep.subr.bf16.mxu0 0
    %130 = vmatpush1.bf16.msra.mxu0 0
    %131 = vmatprep.subr.bf16.mxu0 0
    %132 = vmatpush1.bf16.msra.mxu0 0
    %133 = vmatprep.subr.bf16.mxu0 0
    %134 = vmatpush1.bf16.msra.mxu0 0
    %135 = vmatprep.subr.bf16.mxu0 0
    %136 = vmatpush1.bf16.msra.mxu0 0
    %137 = vmatprep.subr.bf16.mxu0 0
    %138 = vmatpush1.bf16.msra.mxu0 0
    %139 = vmatprep.subr.bf16.mxu0 0
    %140 = vmatpush1.bf16.msra.mxu0 0
    %141 = vmatprep.mubr.bf16.mxu0 0
    %142 = vmatmul.mubr.bf16.gmra.mrb[0].mxu0 %v107
    %v143 = vpop.f32.mrb[0].mxu0
    %v144 = vadd.f32 0.0, %v143
    %v145 = vpop.f32.mrb[0].mxu0
    %v146 = vpop.f32.mrb[0].mxu0
    %v147 = vadd.f32 0.0, %v146
    %v148 = vpop.f32.mrb[0].mxu0
    %149 = vdwg.mxu0
    %v152 = vunpack.c.l.b16 %v87
    %v153 = vunpack.c.l.b16 %v88
    %v154 = vpack.c.b16 %v153, %v152
    %vm155 = vcmask 64512
    %v157 = vsel %vm155, %v154, 0
    %vm159 = vcmask 1043456
    %v161 = vsel %vm159, %v89, 0
    %163 = vmatprep.subr.bf16.mxu0 0
    %164 = vmatpush1.bf16.msra.mxu0 %v161
    %165 = vmatprep.subr.bf16.mxu0 0
    %166 = vmatpush1.bf16.msra.mxu0 0
    %167 = vmatprep.subr.bf16.mxu0 0
    %168 = vmatpush1.bf16.msra.mxu0 0
    %169 = vmatprep.subr.bf16.mxu0 0
    %170 = vmatpush1.bf16.msra.mxu0 0
    %171 = vmatprep.subr.bf16.mxu0 0
    %172 = vmatpush1.bf16.msra.mxu0 0
    %173 = vmatprep.subr.bf16.mxu0 0
    %174 = vmatpush1.bf16.msra.mxu0 0
    %175 = vmatprep.subr.bf16.mxu0 0
    %176 = vmatpush1.bf16.msra.mxu0 0
    %177 = vmatprep.subr.bf16.mxu0 0
    %178 = vmatpush1.bf16.msra.mxu0 0
    %179 = vmatprep.subr.bf16.mxu0 0
    %180 = vmatpush1.bf16.msra.mxu0 0
    %181 = vmatprep.subr.bf16.mxu0 0
    %182 = vmatpush1.bf16.msra.mxu0 0
    %183 = vmatprep.subr.bf16.mxu0 0
    %184 = vmatpush1.bf16.msra.mxu0 0
    %185 = vmatprep.subr.bf16.mxu0 0
    %186 = vmatpush1.bf16.msra.mxu0 0
    %187 = vmatprep.subr.bf16.mxu0 0
    %188 = vmatpush1.bf16.msra.mxu0 0
    %189 = vmatprep.subr.bf16.mxu0 0
    %190 = vmatpush1.bf16.msra.mxu0 0
    %191 = vmatprep.subr.bf16.mxu0 0
    %192 = vmatpush1.bf16.msra.mxu0 0
    %193 = vmatprep.subr.bf16.mxu0 0
    %194 = vmatpush1.bf16.msra.mxu0 0
    %195 = vmatprep.mubr.bf16.mxu0 0
    %196 = vmatmul.mubr.bf16.gmra.mrb[0].mxu0 %v157
    %v197 = vpop.f32.mrb[0].mxu0
    %v198 = vadd.f32 %v144, %v197
    %v199 = vpop.f32.mrb[0].mxu0
    %v200 = vpop.f32.mrb[0].mxu0
    %v201 = vadd.f32 %v147, %v200
    %v202 = vpop.f32.mrb[0].mxu0
    %203 = vdwg.mxu0
    %v204 = vld [vmem:[%s4] sm:$0x1]
    %v206 = vlaneseq
    %v207 = vshrl.u32 %v206, 7
    %v208 = vsub.s32 0, %v207
    %v209 = vrot.slane %v204, %v208
    %v211 = vadd.f32 %v198, %v209
    %v212 = vadd.f32 %v201, %v209
    %v213 = vmax.f32 %v211, 0.0
    %v214 = vmax.f32 %v212, 0.0
    %v215 = vpack.c.bf16 %v214, %v213
    %v216 = vld [vmem:[#allocation2] sm:$0xf]
    %v217 = vld [vmem:[#allocation2 + $0x4] sm:$0xf]
    %v218 = vld [vmem:[#allocation2 + $0x8] sm:$0xf]
    %v219 = vld [vmem:[#allocation2 + $0xc] sm:$0xf]
    %v220 = vld [vmem:[#allocation2 + $0x10] sm:$0xf]
    %v221 = vld [vmem:[#allocation2 + $0x14] sm:$0xf]
    %v222 = vld [vmem:[#allocation2 + $0x18] sm:$0xf]
    %v223 = vld [vmem:[#allocation2 + $0x1c] sm:$0xf]
    %v224 = vld [vmem:[#allocation2 + $0x20] sm:$0xf]
    %v225 = vld [vmem:[#allocation2 + $0x24] sm:$0xf]
    %v226 = vld [vmem:[#allocation2 + $0x28] sm:$0xf]
    %v227 = vld [vmem:[#allocation2 + $0x2c] sm:$0xf]
    %v228 = vld [vmem:[#allocation2 + $0x30] sm:$0xf]
    %v229 = vld [vmem:[#allocation2 + $0x34] sm:$0xf]
    %v230 = vld [vmem:[#allocation2 + $0x38] sm:$0xf]
    %v231 = vld [vmem:[#allocation2 + $0x3c] sm:$0xf]
    %v232 = vld [vmem:[%s6] sm:$0x1]
    %v234 = vlaneseq
    %v235 = vshrl.u32 %v234, 7
    %v236 = vsub.s32 0, %v235
    %v237 = vrot.slane %v232, %v236
    %v255 = vunpack.c.l.b16 %v216
    %v256 = vunpack.c.l.b16 %v217
    %v257 = vunpack.c.l.b16 %v218
    %v258 = vunpack.c.l.b16 %v219
    %v259 = vunpack.c.l.b16 %v220
    %v260 = vunpack.c.l.b16 %v221
    %v261 = vunpack.c.l.b16 %v222
    %v262 = vunpack.c.l.b16 %v223
    %v263 = vunpack.c.l.b16 %v224
    %v264 = vunpack.c.l.b16 %v225
    %v265 = vunpack.c.l.b16 %v226
    %v266 = vunpack.c.l.b16 %v227
    %v267 = vunpack.c.l.b16 %v228
    %v268 = vunpack.c.l.b16 %v229
    %v269 = vunpack.c.l.b16 %v230
    %v270 = vunpack.c.l.b16 %v231
    %v271 = vpack.c.b16 %v256, %v255
    %v272 = vpack.c.b16 %v258, %v257
    %v273 = vpack.c.b16 %v260, %v259
    %v274 = vpack.c.b16 %v262, %v261
    %v275 = vpack.c.b16 %v264, %v263
    %v276 = vpack.c.b16 %v266, %v265
    %v277 = vpack.c.b16 %v268, %v267
    %v278 = vpack.c.b16 %v270, %v269
    %287 = vmatprep.subr.bf16.mxu0 0
    %288 = vmatpush1.bf16.msra.mxu0 %v271
    %289 = vmatprep.subr.bf16.mxu0 0
    %290 = vmatpush1.bf16.msra.mxu0 %v272
    %291 = vmatprep.subr.bf16.mxu0 0
    %292 = vmatpush1.bf16.msra.mxu0 %v273
    %293 = vmatprep.subr.bf16.mxu0 0
    %294 = vmatpush1.bf16.msra.mxu0 %v274
    %295 = vmatprep.subr.bf16.mxu0 0
    %296 = vmatpush1.bf16.msra.mxu0 %v275
    %297 = vmatprep.subr.bf16.mxu0 0
    %298 = vmatpush1.bf16.msra.mxu0 %v276
    %299 = vmatprep.subr.bf16.mxu0 0
    %300 = vmatpush1.bf16.msra.mxu0 %v277
    %301 = vmatprep.subr.bf16.mxu0 0
    %302 = vmatpush1.bf16.msra.mxu0 %v278
    %303 = vmatprep.subr.bf16.mxu0 0
    %304 = vmatpush1.bf16.msra.mxu0 0
    %305 = vmatprep.subr.bf16.mxu0 0
    %306 = vmatpush1.bf16.msra.mxu0 0
    %307 = vmatprep.subr.bf16.mxu0 0
    %308 = vmatpush1.bf16.msra.mxu0 0
    %309 = vmatprep.subr.bf16.mxu0 0
    %310 = vmatpush1.bf16.msra.mxu0 0
    %311 = vmatprep.subr.bf16.mxu0 0
    %312 = vmatpush1.bf16.msra.mxu0 0
    %313 = vmatprep.subr.bf16.mxu0 0
    %314 = vmatpush1.bf16.msra.mxu0 0
    %315 = vmatprep.subr.bf16.mxu0 0
    %316 = vmatpush1.bf16.msra.mxu0 0
    %317 = vmatprep.subr.bf16.mxu0 0
    %318 = vmatpush1.bf16.msra.mxu0 0
    %319 = vmatprep.mubr.bf16.mxu0 0
    %320 = vmatmul.mubr.bf16.gmra.mrb[0].mxu0 %v215
    %v321 = vpop.f32.mrb[0].mxu0
    %v322 = vadd.f32 %v237, %v321
    %v323 = vpop.f32.mrb[0].mxu0
    %v324 = vpop.f32.mrb[0].mxu0
    %v325 = vadd.f32 %v237, %v324
    %v326 = vpop.f32.mrb[0].mxu0
    %327 = vdwg.mxu0
    %v328 = vmax.f32 %v322, 0.0
    %v329 = vmax.f32 %v325, 0.0
    %v330 = vpack.c.bf16 %v329, %v328
    %v331 = vld [vmem:[#allocation5] sm:$0xf]
    %v332 = vld [vmem:[#allocation5 + $0x4] sm:$0xf]
    %v333 = vld [vmem:[#allocation5 + $0x8] sm:$0xf]
    %v334 = vld [vmem:[#allocation5 + $0xc] sm:$0xf]
    %v335 = vld [vmem:[#allocation5 + $0x10] sm:$0xf]
    %v336 = vld [vmem:[#allocation5 + $0x14] sm:$0xf]
    %v337 = vld [vmem:[#allocation5 + $0x18] sm:$0xf]
    %v338 = vld [vmem:[#allocation5 + $0x1c] sm:$0xf]
    %v339 = vld [vmem:[#allocation5 + $0x20] sm:$0xf]
    %v340 = vld [vmem:[#allocation5 + $0x24] sm:$0xf]
    %v341 = vld [vmem:[#allocation5 + $0x28] sm:$0xf]
    %v342 = vld [vmem:[#allocation5 + $0x2c] sm:$0xf]
    %v343 = vld [vmem:[#allocation5 + $0x30] sm:$0xf]
    %v344 = vld [vmem:[#allocation5 + $0x34] sm:$0xf]
    %v345 = vld [vmem:[#allocation5 + $0x38] sm:$0xf]
    %v346 = vld [vmem:[#allocation5 + $0x3c] sm:$0xf]
    %v347 = vld [vmem:[%s8] sm:$0x1]
    %v349 = vlaneseq
    %v350 = vshrl.u32 %v349, 7
    %v351 = vsub.s32 0, %v350
    %v352 = vrot.slane %v347, %v351
    %v370 = vunpack.c.l.b16 %v331
    %v371 = vunpack.c.l.b16 %v332
    %v372 = vunpack.c.l.b16 %v333
    %v373 = vunpack.c.l.b16 %v334
    %v374 = vunpack.c.l.b16 %v335
    %v375 = vunpack.c.l.b16 %v336
    %v376 = vunpack.c.l.b16 %v337
    %v377 = vunpack.c.l.b16 %v338
    %v378 = vunpack.c.l.b16 %v339
    %v379 = vunpack.c.l.b16 %v340
    %v380 = vunpack.c.l.b16 %v341
    %v381 = vunpack.c.l.b16 %v342
    %v382 = vunpack.c.l.b16 %v343
    %v383 = vunpack.c.l.b16 %v344
    %v384 = vunpack.c.l.b16 %v345
    %v385 = vunpack.c.l.b16 %v346
    %v386 = vpack.c.b16 %v371, %v370
    %v387 = vpack.c.b16 %v373, %v372
    %v388 = vpack.c.b16 %v375, %v374
    %v389 = vpack.c.b16 %v377, %v376
    %v390 = vpack.c.b16 %v379, %v378
    %v391 = vpack.c.b16 %v381, %v380
    %v392 = vpack.c.b16 %v383, %v382
    %v393 = vpack.c.b16 %v385, %v384
    %402 = vmatprep.subr.bf16.mxu0 0
    %403 = vmatpush1.bf16.msra.mxu0 %v386
    %404 = vmatprep.subr.bf16.mxu0 0
    %405 = vmatpush1.bf16.msra.mxu0 %v387
    %406 = vmatprep.subr.bf16.mxu0 0
    %407 = vmatpush1.bf16.msra.mxu0 %v388
    %408 = vmatprep.subr.bf16.mxu0 0
    %409 = vmatpush1.bf16.msra.mxu0 %v389
    %410 = vmatprep.subr.bf16.mxu0 0
    %411 = vmatpush1.bf16.msra.mxu0 %v390
    %412 = vmatprep.subr.bf16.mxu0 0
    %413 = vmatpush1.bf16.msra.mxu0 %v391
    %414 = vmatprep.subr.bf16.mxu0 0
    %415 = vmatpush1.bf16.msra.mxu0 %v392
    %416 = vmatprep.subr.bf16.mxu0 0
    %417 = vmatpush1.bf16.msra.mxu0 %v393
    %418 = vmatprep.subr.bf16.mxu0 0
    %419 = vmatpush1.bf16.msra.mxu0 0
    %420 = vmatprep.subr.bf16.mxu0 0
    %421 = vmatpush1.bf16.msra.mxu0 0
    %422 = vmatprep.subr.bf16.mxu0 0
    %423 = vmatpush1.bf16.msra.mxu0 0
    %424 = vmatprep.subr.bf16.mxu0 0
    %425 = vmatpush1.bf16.msra.mxu0 0
    %426 = vmatprep.subr.bf16.mxu0 0
    %427 = vmatpush1.bf16.msra.mxu0 0
    %428 = vmatprep.subr.bf16.mxu0 0
    %429 = vmatpush1.bf16.msra.mxu0 0
    %430 = vmatprep.subr.bf16.mxu0 0
    %431 = vmatpush1.bf16.msra.mxu0 0
    %432 = vmatprep.subr.bf16.mxu0 0
    %433 = vmatpush1.bf16.msra.mxu0 0
    %434 = vmatprep.mubr.bf16.mxu0 0
    %435 = vmatmul.mubr.bf16.gmra.mrb[0].mxu0 %v330
    %v436 = vpop.f32.mrb[0].mxu0
    %v437 = vadd.f32 %v352, %v436
    %v438 = vpop.f32.mrb[0].mxu0
    %v439 = vpop.f32.mrb[0].mxu0
    %v440 = vadd.f32 %v352, %v439
    %v441 = vpop.f32.mrb[0].mxu0
    %442 = vdwg.mxu0
    %v443 = vmax.f32 %v437, 0.0
    %v444 = vmax.f32 %v440, 0.0
    %v445 = vpack.c.bf16 %v444, %v443
    %v446 = vld [vmem:[#allocation7] sm:$0xf]
    %v447 = vld [vmem:[#allocation7 + $0x4] sm:$0xf]
    %v448 = vld [vmem:[#allocation7 + $0x8] sm:$0xf]
    %v449 = vld [vmem:[#allocation7 + $0xc] sm:$0xf]
    %v450 = vld [vmem:[#allocation7 + $0x10] sm:$0xf]
    %v451 = vld [vmem:[#allocation7 + $0x14] sm:$0xf]
    %v452 = vld [vmem:[#allocation7 + $0x18] sm:$0xf]
    %v453 = vld [vmem:[#allocation7 + $0x1c] sm:$0xf]
    %v454 = vld [vmem:[#allocation7 + $0x20] sm:$0xf]
    %v455 = vld [vmem:[#allocation7 + $0x24] sm:$0xf]
    %v456 = vld [vmem:[#allocation7 + $0x28] sm:$0xf]
    %v457 = vld [vmem:[#allocation7 + $0x2c] sm:$0xf]
    %v458 = vld [vmem:[#allocation7 + $0x30] sm:$0xf]
    %v459 = vld [vmem:[#allocation7 + $0x34] sm:$0xf]
    %v460 = vld [vmem:[#allocation7 + $0x38] sm:$0xf]
    %v461 = vld [vmem:[#allocation7 + $0x3c] sm:$0xf]
    %v462 = vld [vmem:[%s10] sm:$0x1]
    %v464 = vlaneseq
    %v465 = vshrl.u32 %v464, 7
    %v466 = vsub.s32 0, %v465
    %v467 = vrot.slane %v462, %v466
    %v485 = vunpack.c.l.b16 %v446
    %v486 = vunpack.c.l.b16 %v447
    %v487 = vunpack.c.l.b16 %v448
    %v488 = vunpack.c.l.b16 %v449
    %v489 = vunpack.c.l.b16 %v450
    %v490 = vunpack.c.l.b16 %v451
    %v491 = vunpack.c.l.b16 %v452
    %v492 = vunpack.c.l.b16 %v453
    %v493 = vunpack.c.l.b16 %v454
    %v494 = vunpack.c.l.b16 %v455
    %v495 = vunpack.c.l.b16 %v456
    %v496 = vunpack.c.l.b16 %v457
    %v497 = vunpack.c.l.b16 %v458
    %v498 = vunpack.c.l.b16 %v459
    %v499 = vunpack.c.l.b16 %v460
    %v500 = vunpack.c.l.b16 %v461
    %v501 = vpack.c.b16 %v486, %v485
    %v502 = vpack.c.b16 %v488, %v487
    %v503 = vpack.c.b16 %v490, %v489
    %v504 = vpack.c.b16 %v492, %v491
    %v505 = vpack.c.b16 %v494, %v493
    %v506 = vpack.c.b16 %v496, %v495
    %v507 = vpack.c.b16 %v498, %v497
    %v508 = vpack.c.b16 %v500, %v499
    %517 = vmatprep.subr.bf16.mxu0 0
    %518 = vmatpush1.bf16.msra.mxu0 %v501
    %519 = vmatprep.subr.bf16.mxu0 0
    %520 = vmatpush1.bf16.msra.mxu0 %v502
    %521 = vmatprep.subr.bf16.mxu0 0
    %522 = vmatpush1.bf16.msra.mxu0 %v503
    %523 = vmatprep.subr.bf16.mxu0 0
    %524 = vmatpush1.bf16.msra.mxu0 %v504
    %525 = vmatprep.subr.bf16.mxu0 0
    %526 = vmatpush1.bf16.msra.mxu0 %v505
    %527 = vmatprep.subr.bf16.mxu0 0
    %528 = vmatpush1.bf16.msra.mxu0 %v506
    %529 = vmatprep.subr.bf16.mxu0 0
    %530 = vmatpush1.bf16.msra.mxu0 %v507
    %531 = vmatprep.subr.bf16.mxu0 0
    %532 = vmatpush1.bf16.msra.mxu0 %v508
    %533 = vmatprep.subr.bf16.mxu0 0
    %534 = vmatpush1.bf16.msra.mxu0 0
    %535 = vmatprep.subr.bf16.mxu0 0
    %536 = vmatpush1.bf16.msra.mxu0 0
    %537 = vmatprep.subr.bf16.mxu0 0
    %538 = vmatpush1.bf16.msra.mxu0 0
    %539 = vmatprep.subr.bf16.mxu0 0
    %540 = vmatpush1.bf16.msra.mxu0 0
    %541 = vmatprep.subr.bf16.mxu0 0
    %542 = vmatpush1.bf16.msra.mxu0 0
    %543 = vmatprep.subr.bf16.mxu0 0
    %544 = vmatpush1.bf16.msra.mxu0 0
    %545 = vmatprep.subr.bf16.mxu0 0
    %546 = vmatpush1.bf16.msra.mxu0 0
    %547 = vmatprep.subr.bf16.mxu0 0
    %548 = vmatpush1.bf16.msra.mxu0 0
    %549 = vmatprep.mubr.bf16.mxu0 0
    %550 = vmatmul.mubr.bf16.gmra.mrb[0].mxu0 %v445
    %v551 = vpop.f32.mrb[0].mxu0
    %v552 = vadd.f32 %v467, %v551
    %v553 = vpop.f32.mrb[0].mxu0
    %v554 = vpop.f32.mrb[0].mxu0
    %v555 = vadd.f32 %v467, %v554
    %v556 = vpop.f32.mrb[0].mxu0
    %557 = vdwg.mxu0
    %v558 = vmax.f32 %v552, 0.0
    %v559 = vmax.f32 %v555, 0.0
    %v560 = vpack.c.bf16 %v559, %v558
    %v561 = vld [vmem:[%s11] sm:$0xf]
    %v562 = vld [vmem:[%s12] sm:$0xff]
    %564 = vset.pattern.permute.xlu0 0
    %565 = vperm.xlu0 %564, %v562
    %v566 = vpop.permute.xlu0 %565
    %568 = vmatprep.subr.bf16.mxu0 0
    %569 = vmatpush1.bf16.xpose.msra.mxu0 %v560
    %570 = vmatprep.subr.bf16.mxu0 0
    %571 = vmatpush1.bf16.xpose.msra.mxu0 0
    %572 = vmatprep.subr.bf16.mxu0 0
    %573 = vmatpush1.bf16.xpose.msra.mxu0 0
    %574 = vmatprep.subr.bf16.mxu0 0
    %575 = vmatpush1.bf16.xpose.msra.mxu0 0
    %576 = vmatprep.subr.bf16.mxu0 0
    %577 = vmatpush1.bf16.xpose.msra.mxu0 0
    %578 = vmatprep.subr.bf16.mxu0 0
    %579 = vmatpush1.bf16.xpose.msra.mxu0 0
    %580 = vmatprep.subr.bf16.mxu0 0
    %581 = vmatpush1.bf16.xpose.msra.mxu0 0
    %582 = vmatprep.subr.bf16.mxu0 0
    %583 = vmatpush1.bf16.xpose.msra.mxu0 0
    %584 = vmatprep.subr.bf16.mxu0 0
    %585 = vmatpush1.bf16.xpose.msra.mxu0 0
    %586 = vmatprep.subr.bf16.mxu0 0
    %587 = vmatpush1.bf16.xpose.msra.mxu0 0
    %588 = vmatprep.subr.bf16.mxu0 0
    %589 = vmatpush1.bf16.xpose.msra.mxu0 0
    %590 = vmatprep.subr.bf16.mxu0 0
    %591 = vmatpush1.bf16.xpose.msra.mxu0 0
    %592 = vmatprep.subr.bf16.mxu0 0
    %593 = vmatpush1.bf16.xpose.msra.mxu0 0
    %594 = vmatprep.subr.bf16.mxu0 0
    %595 = vmatpush1.bf16.xpose.msra.mxu0 0
    %596 = vmatprep.subr.bf16.mxu0 0
    %597 = vmatpush1.bf16.xpose.msra.mxu0 0
    %598 = vmatprep.subr.bf16.mxu0 0
    %599 = vmatpush1.bf16.xpose.msra.mxu0 0
    %600 = vmatprep.mubr.bf16.mxu0 0
    %601 = vmatmul.mubr.bf16.gmra.mrb[0].mxu0 %v561
    %v602 = vpop.f32.mrb[0].mxu0
    %v603 = vadd.f32 %v566, %v602
    %v604 = vpop.f32.mrb[0].mxu0
    %v605 = vpop.f32.mrb[0].mxu0
    %v606 = vpop.f32.mrb[0].mxu0
    %607 = vdwg.mxu0
    %608 = vst.msk [vmem:[#allocation8] sm:$0xff] %vm105, %v603
    // Predicated region
    $region66: #{tpu_custom_call.1} parent=1 // pred_check
      _
    $region67: #{tpu_custom_call.1} parent=1 // pred_check_branch
      %610 = sbr.rel (0) target = $region69
    $region68: #{tpu_custom_call.1} parent=1 // pred_region
      %s612 = ssub.s32 128, 128
      %613 = vsyncadd [#allocation4], %s612
      %s615 = sshll.u32 [#allocation8], 4
      %s616 = int_to_ptr.vmem [resolvable:$true] %s615
      %618 = dma.vmem_to_hbm [thread:$0]  %s616, 128, %s13, [#allocation4]
    $region69: #{tpu_custom_call.1} parent=1 // pred_fallthru
      _
    // Predicated region
    $region70: #{tpu_custom_call.1} parent=1 // pred_check
      _
    $region71: #{tpu_custom_call.1} parent=1 // pred_check_branch
      %620 = sbr.rel (0) target = $region73
    $region72: #{tpu_custom_call.1} parent=1 // pred_region
      %621 = dma.done [#allocation4], 128
    $region73: #{tpu_custom_call.1} parent=1 // pred_fallthru
      _
    %622 = vsyncpa [#allocation3], 1
    %623 = vsyncpa [#allocation6], 1
    %624 = vsyncpa [#allocation4], 1

</llo_original>
